<compile_context>
chip_gen: v7x
topology: tpu7x:2x2x1
jax: 0.10.0
libtpu: 0.0.40
codegen_flags: <defaults>
</compile_context>

<pallas_src>
import numpy as np
import jax
import jax.numpy as jnp
from jax import lax
from jax.experimental import pallas as pl
from jax.experimental.pallas import tpu as pltpu

NBV = 2.16e-2          # buoyancy frequency [1/s] (qbo1d utils.NBV)
NW = 20                # number of waves in the control spectrum


# --------------------------------------------------------------------------
# Deterministic parameter construction (host glue, plain NumPy / JAX)
# --------------------------------------------------------------------------
# TODO(synk): qbo1d.utils.get_rho/get_alpha and torch's MultivariateNormal RNG
# are replaced by deterministic host-side stand-ins (same functional form);
# this is init-time glue, not kernel work.
def get_rho(z):
    return 1.2 * np.exp(-z / 7.0e3)


def get_alpha(z):
    return (1.0 / 21.0 + (1.0 / 7.0 - 1.0 / 21.0) * (z - z[0]) / (z[-1] - z[0])) / 86400.0


def sample_sf_cw(n, sfe, sfv, cwe, cwv, corr, seed):
    es = np.array([sfe, cwe], dtype=np.float64)
    vs = np.array([sfv, cwv], dtype=np.float64)
    mu = -0.5 * np.log(vs / es ** 4 + 1.0 / es ** 2)
    variances = np.log(es ** 2) - 2.0 * mu
    c01 = corr * np.sqrt(variances[0] * variances[1])
    sigma = np.array([[variances[0], c01], [c01, variances[1]]])
    L = np.linalg.cholesky(sigma)
    zn = np.asarray(jax.random.normal(jax.random.PRNGKey(seed), (n, 2)), dtype=np.float64)
    samples = mu[None, :] + zn @ L.T
    ln = np.exp(samples)
    return ln[:, 0], ln[:, 1]


def sample_sf_cw_complex(n, sfe, sfv, cwe, cwv, corr, seed):
    sf, cw = sample_sf_cw(n, sfe, sfv, cwe, cwv, corr, seed)
    k = 5
    b_sf_max = 0.0005
    b_cw_max = 5.0
    i = np.arange(n, dtype=np.float64)
    b_sf = i / n * b_sf_max * np.sin(i / n * k * np.pi)
    b_cw = i / n * b_cw_max * np.cos(i / n * k * np.pi)
    return sf + b_sf, cw + b_cw


# --------------------------------------------------------------------------
# Fused Pallas kernel: all `batch` timesteps in one invocation, all 2-D math
# --------------------------------------------------------------------------
def _build_forward_call(nlev, nw, batch):
    nrows = nw * batch  # rows ordered wave-major: row w*batch + b

    def kernel(u_ref, rep_ref, galpha_ref, cs_ref, amp_ref, wtneg_ref, dmat_ref, s_ref):
        u = u_ref[...]                                            # (batch, nlev)
        if batch == 1:
            # sublane broadcast is free; rep_ref is unused on this path
            u_rep = jnp.broadcast_to(u, (nrows, nlev))
        else:
            # replicate u[b] into rows w*batch+b via a 0/1 matrix (tiny MXU op)
            u_rep = jnp.dot(rep_ref[...], u, preferred_element_type=jnp.float32)

        diff = cs_ref[...] - u_rep                                # (nrows, nlev)
        denom = jnp.maximum(diff * diff, 1e-30)                   # critical-level clamp
        g = galpha_ref[...] * pl.reciprocal(denom, approx=True)   # EUP reciprocal

        # minus-cumulative-trapezoid along z; sign folded into the weights (MXU)
        integ = jnp.dot(g, wtneg_ref[...], preferred_element_type=jnp.float32)

        # wave reduction with amplitudes folded into AMP (EUP exp + MXU)
        ftot = jnp.dot(amp_ref[...], jnp.exp(integ),
                       preferred_element_type=jnp.float32)        # (batch, nlev)

        # s = (D1 @ Ftot) * rho0/rho, both folded into DMAT (MXU)
        s_ref[...] = jnp.dot(ftot, dmat_ref[...], preferred_element_type=jnp.float32)

    flops = 2 * (nrows * batch * nlev + nrows * nlev * nlev
                 + batch * nrows * nlev + batch * nlev * nlev) + 6 * nrows * nlev
    transcendentals = 2 * nrows * nlev                   # exp + approx reciprocal
    bytes_accessed = 4 * (2 * batch * nlev + nrows * batch + nlev + nrows
                          + batch * nrows + 2 * nlev * nlev)

    return pl.pallas_call(
        kernel,
        out_shape=jax.ShapeDtypeStruct((batch, nlev), jnp.float32),
        grid=(1,),
        in_specs=[
            pl.BlockSpec((batch, nlev), lambda i: (0, 0)),    # u        (per call)
            pl.BlockSpec((nrows, batch), lambda i: (0, 0)),   # REP      (constant)
            pl.BlockSpec((1, nlev), lambda i: (0, 0)),        # galpha   (constant)
            pl.BlockSpec((nrows, 1), lambda i: (0, 0)),       # cs       (constant)
            pl.BlockSpec((batch, nrows), lambda i: (0, 0)),   # AMP      (per call)
            pl.BlockSpec((nlev, nlev), lambda i: (0, 0)),     # -W^T     (constant)
            pl.BlockSpec((nlev, nlev), lambda i: (0, 0)),     # DMAT     (constant)
        ],
        out_specs=pl.BlockSpec((batch, nlev), lambda i: (0, 0)),
        compiler_params=pltpu.CompilerParams(dimension_semantics=("arbitrary",)),
        cost_estimate=pl.CostEstimate(flops=int(flops),
                                      transcendentals=int(transcendentals),
                                      bytes_accessed=int(bytes_accessed)),
    )


def _build_step_fn(nlev, nw, batch):
    """One jitted program: Pallas kernel + in-place-style self.s update."""
    call = _build_forward_call(nlev, nw, batch)

    def fn(u_all, rep, galpha, cs_flat, amp, wtneg, dmat, s_state, st):
        s_all = call(u_all, rep, galpha, cs_flat, amp, wtneg, dmat)
        new_state = lax.dynamic_update_slice_in_dim(s_state, s_all, st, axis=0)
        return s_all, new_state

    return jax.jit(fn)


# --------------------------------------------------------------------------
# JAX port of the module (param construction on host, all compute on device)
# --------------------------------------------------------------------------
class ComplexWaveSpectrum:
    def __init__(self, nlev=64, nsteps=8, dz=250.0,
                 sfe=0.0037, sfv=1e-8, cwe=32.0, cwv=225.0, corr=0.75,
                 seed=int(21 * 9 + 8)):
        self._nlev = nlev
        self._nsteps = nsteps
        self._dz = dz

        z = 17.0e3 + dz * np.arange(nlev, dtype=np.float64)
        self._z = z
        self._rho = get_rho(z)
        self._alpha = get_alpha(z)
        self._current_step = 0
        self.s = jnp.zeros((nsteps, nlev), dtype=jnp.float32)   # device-resident

        self.sf, self.cw = sample_sf_cw_complex(nsteps, sfe, sfv, cwe, cwv, corr, seed)

        # Control spectrum: 20 waves, equal wavenumbers, phase speeds +-[10, 100].
        self.ks = 2.0 * 2.0 * np.pi / 4.0e7 * np.ones(NW)
        self.cs = np.concatenate([np.arange(-100.0, 0.0, 10.0),
                                  np.arange(10.0, 110.0, 10.0)])

        # Wave amplitudes per timestep (AD99 eq. 17 style).
        As = np.exp(-np.log(2.0) * (self.cs[None, :] / self.cw[:, None]) ** 2)
        As = As * np.sign(self.cs)[None, :]
        As = As * (self.sf[:, None] / np.abs(As).sum(axis=1, keepdims=True) / 0.1006)
        self.As = As

        # D1: first-derivative matrix (kept for the NumPy reference + DMAT fold).
        D1 = np.zeros((nlev, nlev))
        for i in range(1, nlev - 1):
            D1[i, i - 1] = -1.0 / (2.0 * dz)
            D1[i, i + 1] = 1.0 / (2.0 * dz)
        D1[0, 0], D1[0, 1] = -1.0 / dz, 1.0 / dz
        D1[-1, -2], D1[-1, -1] = -1.0 / dz, 1.0 / dz
        self._D1 = D1

        # Cumulative trapezoid (leading zero) as a matmul; minus sign folded in.
        W = np.zeros((nlev, nlev))
        for j in range(1, nlev):
            W[j, 0] = dz / 2.0
            W[j, 1:j] = dz
            W[j, j] = dz / 2.0
        self._W = W

        f32 = jnp.float32
        # galpha = NBV * alpha / k  (k identical for all waves)
        self._galpha_row = jnp.asarray(
            (NBV * self._alpha / self.ks[0]).reshape(1, nlev), f32)
        self._WTneg_dev = jnp.asarray(-W.T, f32)
        # DMAT[z, y] = D1[y, z] * rho0/rho[y]  ->  s = Ftot @ DMAT
        self._dmat_dev = jnp.asarray(
            (D1 * (self._rho[0] / self._rho)[:, None]).T, f32)

        # Per-batch-size caches (compiled fn, constant REP / cs operands).
        self._fns = {}
        self._reps = {}
        self._cs_flats = {}

    # ---- cached per-batch-size operands / compiled programs ----
    def _get_fn(self, k):
        if k not in self._fns:
            self._fns[k] = _build_step_fn(self._nlev, NW, k)
        return self._fns[k]

    def _get_rep(self, k):
        if k not in self._reps:
            rep = np.zeros((NW * k, k), dtype=np.float32)
            idx = np.arange(NW * k)
            rep[idx, idx % k] = 1.0                       # row w*k+b picks u[b]
            self._reps[k] = jnp.asarray(rep)
        return self._reps[k]

    def _get_cs_flat(self, k):
        if k not in self._cs_flats:
            self._cs_flats[k] = jnp.asarray(
                np.repeat(self.cs, k).reshape(NW * k, 1).astype(np.float32))
        return self._cs_flats[k]

    def _make_amp(self, st, k):
        """AMP[b, w*k+b] = As[st+b, w]; folds amplitudes into the wave reduction."""
        amp = np.zeros((k, NW * k), dtype=np.float32)
        blk = self.As[st:st + k].astype(np.float32)        # (k, NW)
        rows = np.arange(k)
        for w in range(NW):
            amp[rows, w * k + rows] = blk[:, w]
        return jnp.asarray(amp)

    # ---- forward paths ----
    def forward_steps(self, u_all):
        """Process several timesteps fused into one kernel invocation.

        u_all: (k, nlev) zonal wind for steps [current_step, current_step+k).
        Returns (k, nlev); self.s is updated on device in the same dispatch.
        """
        st = self._current_step
        u_all = jnp.asarray(u_all, jnp.float32).reshape(-1, self._nlev)
        k = int(u_all.shape[0])
        fn = self._get_fn(k)
        s_all, self.s = fn(u_all, self._get_rep(k), self._galpha_row,
                           self._get_cs_flat(k), self._make_amp(st, k),
                           self._WTneg_dev, self._dmat_dev,
                           self.s, jnp.int32(st))
        self._current_step += k
        return s_all

    def forward(self, u):
        """u: (nlev,) zonal wind -> s: (nlev,). Prefer forward_steps for batches."""
        return self.forward_steps(jnp.asarray(u, jnp.float32).reshape(1, self._nlev))[0]

    __call__ = forward


# --------------------------------------------------------------------------
# Pure NumPy reference (mirrors the torch forward, in float64)
# --------------------------------------------------------------------------
def reference_forward(u, A, cs, ks, alpha, dz, D1, rho):
    u = np.asarray(u, np.float64)
    Ftot = np.zeros_like(u)
    for a, c, k in zip(A, cs, ks):
        g = NBV * alpha / (k * (c - u) ** 2)
        cum = np.concatenate([[0.0], np.cumsum(dz * (g[:-1] + g[1:]) / 2.0)])
        Ftot += a * np.exp(-cum)
    return D1 @ Ftot * rho[0] / rho


def _check(s_dev, s_ref, tag, rtol=5e-3):
    # rtol accommodates the EUP approximate reciprocal (review-requested
    # approx=True); wrong math would be off by orders of magnitude.
    s_np = np.asarray(s_dev, np.float64).reshape(-1)
    s_ref = np.asarray(s_ref, np.float64).reshape(-1)
    assert np.all(np.isfinite(s_np)), f"{tag}: non-finite values"
    scale = max(np.max(np.abs(s_ref)), 1e-30)
    err = np.max(np.abs(s_np - s_ref))
    assert err <= rtol * scale, f"{tag}: mismatch vs reference (err={err}, scale={scale})"


if __name__ == "__main__":
    nlev = 64
    nsteps = 8
    dz = 250.0

    key = jax.random.PRNGKey(0)
    k_single, k_batch = jax.random.split(key)

    # ---- per-step path (module forward semantics) ----
    spec = ComplexWaveSpectrum(nlev=nlev, nsteps=nsteps, dz=dz)
    u = 8.0 * jax.random.normal(k_single, (nlev,), dtype=jnp.float32)
    s = spec.forward(u)
    jax.block_until_ready(s)
    s_ref = reference_forward(np.asarray(u), spec.As[0], spec.cs, spec.ks,
                              spec._alpha, dz, spec._D1, spec._rho)
    _check(s, s_ref, "per-step")
    _check(np.asarray(spec.s)[0], s_ref, "per-step state row")

    # ---- batched path: all timesteps fused into one kernel invocation ----
    spec2 = ComplexWaveSpectrum(nlev=nlev, nsteps=nsteps, dz=dz)
    u_all = 8.0 * jax.random.normal(k_batch, (nsteps, nlev), dtype=jnp.float32)
    s_all = spec2.forward_steps(u_all)
    jax.block_until_ready(s_all)
    u_all_np = np.asarray(u_all)
    for t in range(nsteps):
        s_ref_t = reference_forward(u_all_np[t], spec2.As[t], spec2.cs, spec2.ks,
                                    spec2._alpha, dz, spec2._D1, spec2._rho)
        _check(s_all[t], s_ref_t, f"batched step {t}")
        _check(np.asarray(spec2.s)[t], s_ref_t, f"batched state row {t}")

    print("KERNEL_OK")
</pallas_src>

<mosaic_0001>
module attributes {stable_mosaic.version = 11 : i64} {
  func.func @kernel(%arg0: i32, %arg1: memref<1x64xf32, #tpu.memory_space<vmem>>, %arg2: memref<20x1xf32, #tpu.memory_space<vmem>>, %arg3: memref<1x64xf32, #tpu.memory_space<vmem>>, %arg4: memref<20x1xf32, #tpu.memory_space<vmem>>, %arg5: memref<1x20xf32, #tpu.memory_space<vmem>>, %arg6: memref<64x64xf32, #tpu.memory_space<vmem>>, %arg7: memref<64x64xf32, #tpu.memory_space<vmem>>, %arg8: memref<1x64xf32, #tpu.memory_space<vmem>>) attributes {dimension_semantics = [#tpu.dimension_semantics<arbitrary>], iteration_bounds = array<i64: 1>, scalar_prefetch = 0 : i64, scratch_operands = 0 : i64, tpu.core_type = #tpu.core_type<tc>, window_params = [{pipeline_mode = #tpu.pipeline_mode<synchronous>, transform_indices = @transform_0, window_bounds = array<i64: 1, 64>}, {pipeline_mode = #tpu.pipeline_mode<synchronous>, transform_indices = @transform_1, window_bounds = array<i64: 20, 1>}, {pipeline_mode = #tpu.pipeline_mode<synchronous>, transform_indices = @transform_2, window_bounds = array<i64: 1, 64>}, {pipeline_mode = #tpu.pipeline_mode<synchronous>, transform_indices = @transform_3, window_bounds = array<i64: 20, 1>}, {pipeline_mode = #tpu.pipeline_mode<synchronous>, transform_indices = @transform_4, window_bounds = array<i64: 1, 20>}, {pipeline_mode = #tpu.pipeline_mode<synchronous>, transform_indices = @transform_5, window_bounds = array<i64: 64, 64>}, {pipeline_mode = #tpu.pipeline_mode<synchronous>, transform_indices = @transform_6, window_bounds = array<i64: 64, 64>}, {pipeline_mode = #tpu.pipeline_mode<synchronous>, transform_indices = @transform_7, window_bounds = array<i64: 1, 64>}]} {
    %c0 = arith.constant 0 : index
    %c0_0 = arith.constant 0 : index
    %0 = vector.load %arg1[%c0, %c0_0] : memref<1x64xf32, #tpu.memory_space<vmem>>, vector<1x64xf32>
    %1 = vector.shape_cast %0 : vector<1x64xf32> to vector<1x64xf32>
    %2 = vector.broadcast %1 : vector<1x64xf32> to vector<20x64xf32>
    %c0_1 = arith.constant 0 : index
    %c0_2 = arith.constant 0 : index
    %3 = vector.load %arg4[%c0_1, %c0_2] : memref<20x1xf32, #tpu.memory_space<vmem>>, vector<20x1xf32>
    %4 = vector.broadcast %3 : vector<20x1xf32> to vector<20x64xf32>
    %5 = arith.subf %4, %2 : vector<20x64xf32>
    %6 = arith.mulf %5, %5 : vector<20x64xf32>
    %cst = arith.constant 1.000000e-30 : f32
    %7 = vector.broadcast %cst : f32 to vector<20x64xf32>
    %8 = arith.maximumf %6, %7 : vector<20x64xf32>
    %c0_3 = arith.constant 0 : index
    %c0_4 = arith.constant 0 : index
    %9 = vector.load %arg3[%c0_3, %c0_4] : memref<1x64xf32, #tpu.memory_space<vmem>>, vector<1x64xf32>
    %10 = tpu.reciprocal %8 {approx = true} : vector<20x64xf32> -> vector<20x64xf32>
    %11 = vector.broadcast %9 : vector<1x64xf32> to vector<20x64xf32>
    %12 = arith.mulf %11, %10 : vector<20x64xf32>
    %c0_5 = arith.constant 0 : index
    %c0_6 = arith.constant 0 : index
    %13 = vector.load %arg6[%c0_5, %c0_6] : memref<64x64xf32, #tpu.memory_space<vmem>>, vector<64x64xf32>
    %cst_7 = arith.constant dense<0.000000e+00> : vector<20x64xf32>
    %14 = tpu.matmul %12, %13, %cst_7 {dimension_numbers = #tpu.dot_dimension_numbers<[1], [0], [0], [1], [0, 0, 1, 1], [], []>} : vector<20x64xf32>, vector<64x64xf32>, vector<20x64xf32> -> vector<20x64xf32>
    %c0_8 = arith.constant 0 : index
    %c0_9 = arith.constant 0 : index
    %15 = vector.load %arg5[%c0_8, %c0_9] : memref<1x20xf32, #tpu.memory_space<vmem>>, vector<1x20xf32>
    %16 = math.exp %14 : vector<20x64xf32>
    %cst_10 = arith.constant dense<0.000000e+00> : vector<1x64xf32>
    %17 = tpu.matmul %15, %16, %cst_10 {dimension_numbers = #tpu.dot_dimension_numbers<[1], [0], [0], [1], [0, 0, 1, 1], [], []>} : vector<1x20xf32>, vector<20x64xf32>, vector<1x64xf32> -> vector<1x64xf32>
    %c0_11 = arith.constant 0 : index
    %c0_12 = arith.constant 0 : index
    %18 = vector.load %arg7[%c0_11, %c0_12] : memref<64x64xf32, #tpu.memory_space<vmem>>, vector<64x64xf32>
    %cst_13 = arith.constant dense<0.000000e+00> : vector<1x64xf32>
    %19 = tpu.matmul %17, %18, %cst_13 {dimension_numbers = #tpu.dot_dimension_numbers<[1], [0], [0], [1], [0, 0, 1, 1], [], []>} : vector<1x64xf32>, vector<64x64xf32>, vector<1x64xf32> -> vector<1x64xf32>
    %c0_14 = arith.constant 0 : index
    %c0_15 = arith.constant 0 : index
    %20 = vector.load %arg8[%c0_14, %c0_15] : memref<1x64xf32, #tpu.memory_space<vmem>>, vector<1x64xf32>
    tpu.vector_store %arg8[%c0_14, %c0_15], %19 {strides = array<i32>} : memref<1x64xf32, #tpu.memory_space<vmem>>, vector<1x64xf32>,
    return
  }
  func.func @transform_0(%arg0: i32) -> (i32, i32) {
    %c0_i32 = arith.constant 0 : i32
    %c0_i32_0 = arith.constant 0 : i32
    %c0_i32_1 = arith.constant 0 : i32
    return %c0_i32, %c0_i32_0 : i32, i32
  }
  func.func @transform_1(%arg0: i32) -> (i32, i32) {
    %c0_i32 = arith.constant 0 : i32
    %c0_i32_0 = arith.constant 0 : i32
    %c0_i32_1 = arith.constant 0 : i32
    return %c0_i32, %c0_i32_0 : i32, i32
  }
  func.func @transform_2(%arg0: i32) -> (i32, i32) {
    %c0_i32 = arith.constant 0 : i32
    %c0_i32_0 = arith.constant 0 : i32
    %c0_i32_1 = arith.constant 0 : i32
    return %c0_i32, %c0_i32_0 : i32, i32
  }
  func.func @transform_3(%arg0: i32) -> (i32, i32) {
    %c0_i32 = arith.constant 0 : i32
    %c0_i32_0 = arith.constant 0 : i32
    %c0_i32_1 = arith.constant 0 : i32
    return %c0_i32, %c0_i32_0 : i32, i32
  }
  func.func @transform_4(%arg0: i32) -> (i32, i32) {
    %c0_i32 = arith.constant 0 : i32
    %c0_i32_0 = arith.constant 0 : i32
    %c0_i32_1 = arith.constant 0 : i32
    return %c0_i32, %c0_i32_0 : i32, i32
  }
  func.func @transform_5(%arg0: i32) -> (i32, i32) {
    %c0_i32 = arith.constant 0 : i32
    %c0_i32_0 = arith.constant 0 : i32
    %c0_i32_1 = arith.constant 0 : i32
    return %c0_i32, %c0_i32_0 : i32, i32
  }
  func.func @transform_6(%arg0: i32) -> (i32, i32) {
    %c0_i32 = arith.constant 0 : i32
    %c0_i32_0 = arith.constant 0 : i32
    %c0_i32_1 = arith.constant 0 : i32
    return %c0_i32, %c0_i32_0 : i32, i32
  }
  func.func @transform_7(%arg0: i32) -> (i32, i32) {
    %c0_i32 = arith.constant 0 : i32
    %c0_i32_0 = arith.constant 0 : i32
    %c0_i32_1 = arith.constant 0 : i32
    return %c0_i32, %c0_i32_0 : i32, i32
  }
}

</mosaic_0001>

<llo_original>
// kernel: fn.1
$region0: #{fn.1}
  #allocation0 [shape = 'u32[]', space=smem, size = 0x4, offset = 0x4, fixed_abs, tag = 'smem constant byte address 0x4 - core index']
  #allocation1 [shape = 'u32[144,128]{1,0:T(1,128)}', space=vmem, size = 0x12000, scoped, tag = 'internal scratch']
  %s0 = inlined_call_operand.vmem [shape: f32[1,64], index: 0, kind: input, shape index: {}]
  %s1 = inlined_call_operand.vmem [shape: f32[20,1], index: 1, kind: input, shape index: {}]
  %s2 = inlined_call_operand.vmem [shape: f32[1,64], index: 2, kind: input, shape index: {}]
  %s3 = inlined_call_operand.vmem [shape: f32[20,1], index: 3, kind: input, shape index: {}]
  %s4 = inlined_call_operand.vmem [shape: f32[1,20], index: 4, kind: input, shape index: {}]
  %s5 = inlined_call_operand.vmem [shape: f32[64,64], index: 5, kind: input, shape index: {}]
  %s6 = inlined_call_operand.hbm [shape: f32[64,64], index: 6, kind: input, shape index: {}]
  %s7 = inlined_call_operand.vmem [shape: f32[1,64], index: 7, kind: output, shape index: {}]
  %s8 = sld [smem:[#allocation0]]
  $region42: #{fn.1} parent=0
    _
  %s10 = ssub.s32 1, %s8
  %s11 = scalar_select 0, %s10, %s8
  $region1: #{fn.1} parent=0
    #allocation2 [shape = 'u8[32768]{0}', space=vmem, size = 0x8000, scoped, tag = 'input window, operand 6, single buffered']
    #allocation3 [shape = 's32[1]{0}', space=sflag, size = 0x4, scoped, tag = 'scoped memory for fn.1']
    %12 = vsyncpa [#allocation3], 0
    // Predicated region
    $region2: #{fn.1} parent=1 // pred_check
      _
    $region3: #{fn.1} parent=1 // pred_check_branch
      %14 = sbr.rel (0) target = $region5
    $region4: #{fn.1} parent=1 // pred_region
      _
    $region5: #{fn.1} parent=1 // pred_fallthru
      _
    // Predicated region
    $region6: #{fn.1} parent=1 // pred_check
      _
    $region7: #{fn.1} parent=1 // pred_check_branch
      %16 = sbr.rel (0) target = $region9
    $region8: #{fn.1} parent=1 // pred_region
      _
    $region9: #{fn.1} parent=1 // pred_fallthru
      _
    // Predicated region
    $region10: #{fn.1} parent=1 // pred_check
      _
    $region11: #{fn.1} parent=1 // pred_check_branch
      %18 = sbr.rel (0) target = $region13
    $region12: #{fn.1} parent=1 // pred_region
      _
    $region13: #{fn.1} parent=1 // pred_fallthru
      _
    // Predicated region
    $region14: #{fn.1} parent=1 // pred_check
      _
    $region15: #{fn.1} parent=1 // pred_check_branch
      %20 = sbr.rel (0) target = $region17
    $region16: #{fn.1} parent=1 // pred_region
      _
    $region17: #{fn.1} parent=1 // pred_fallthru
      _
    // Predicated region
    $region18: #{fn.1} parent=1 // pred_check
      _
    $region19: #{fn.1} parent=1 // pred_check_branch
      %22 = sbr.rel (0) target = $region21
    $region20: #{fn.1} parent=1 // pred_region
      _
    $region21: #{fn.1} parent=1 // pred_fallthru
      _
    // Predicated region
    $region22: #{fn.1} parent=1 // pred_check
      _
    $region23: #{fn.1} parent=1 // pred_check_branch
      %24 = sbr.rel (0) target = $region25
    $region24: #{fn.1} parent=1 // pred_region
      _
    $region25: #{fn.1} parent=1 // pred_fallthru
      _
    // Predicated region
    $region26: #{fn.1} parent=1 // pred_check
      _
    $region27: #{fn.1} parent=1 // pred_check_branch
      %26 = sbr.rel (0) target = $region29
    $region28: #{fn.1} parent=1 // pred_region
      %s28 = ssub.s32 1024, 1024
      %29 = vsyncadd [#allocation3], %s28
      %s30 = sshll.u32 [#allocation2], 4
      %s31 = int_to_ptr.vmem [resolvable:$true] %s30
      %36 = dma.hbm_to_vmem [thread:$0]  %s6, 1024, %s31, [#allocation3], 128, 128, 8
    $region29: #{fn.1} parent=1 // pred_fallthru
      _
    // Predicated region
    $region30: #{fn.1} parent=1 // pred_check
      _
    $region31: #{fn.1} parent=1 // pred_check_branch
      %38 = sbr.rel (0) target = $region33
    $region32: #{fn.1} parent=1 // pred_region
      %39 = dma.done [#allocation3], 1024
    $region33: #{fn.1} parent=1 // pred_fallthru
      _
    %v40 = vld [vmem:[%s0] sm:$0x1]
    %v42 = vlaneseq
    %v43 = vshrl.u32 %v42, 7
    %v44 = vsub.s32 0, %v43
    %v45 = vrot.slane %v40, %v44
    %v47 = vld [vmem:[%s3] sm:$0xff]
    %v48 = vld [vmem:[%s3 + $0x8] sm:$0xff]
    %v49 = vld [vmem:[%s3 + $0x10] sm:$0xf]
    %51 = vset.pattern.permute.xlu0 0
    %52 = vperm.xlu0 %51, %v47
    %v53 = vpop.permute.xlu0 %52
    %56 = vset.pattern.permute.xlu0 0
    %57 = vperm.xlu0 %56, %v48
    %v58 = vpop.permute.xlu0 %57
    %61 = vset.pattern.permute.xlu0 0
    %62 = vperm.xlu0 %61, %v49
    %v63 = vpop.permute.xlu0 %62
    %v65 = vsub.f32 %v53, %v45
    %v66 = vsub.f32 %v58, %v45
    %v67 = vsub.f32 %v63, %v45
    %v68 = vmul.f32 %v65, %v65
    %v69 = vmul.f32 %v66, %v66
    %v70 = vmul.f32 %v67, %v67
    %v71 = vmax.f32 %v68, 1e-30
    %v72 = vmax.f32 %v69, 1e-30
    %v73 = vmax.f32 %v70, 1e-30
    %v74 = vld [vmem:[%s2] sm:$0x1]
    %v75 = vrcp.pop %v71
    %v76 = vrcp.pop %v72
    %v77 = vrcp.pop %v73
    %v79 = vlaneseq
    %v80 = vshrl.u32 %v79, 7
    %v81 = vsub.s32 0, %v80
    %v82 = vrot.slane %v74, %v81
    %v84 = vmul.f32 %v82, %v75
    %v85 = vmul.f32 %v82, %v76
    %v86 = vmul.f32 %v82, %v77
    %v87 = vld [vmem:[%s5] sm:$0xff]
    %v88 = vld [vmem:[%s5 + $0x8] sm:$0xff]
    %v89 = vld [vmem:[%s5 + $0x10] sm:$0xff]
    %v90 = vld [vmem:[%s5 + $0x18] sm:$0xff]
    %v91 = vld [vmem:[%s5 + $0x20] sm:$0xff]
    %v92 = vld [vmem:[%s5 + $0x28] sm:$0xff]
    %v93 = vld [vmem:[%s5 + $0x30] sm:$0xff]
    %v94 = vld [vmem:[%s5 + $0x38] sm:$0xff]
    %vm95 = vcmask 523264
    %v97 = vsel %vm95, %v84, 0
    %v100 = vsel %vm95, %v85, 0
    %v103 = vsel %vm95, %v86, 0
    %105 = vmatprep.subr.mxu0 0.0
    %106 = vmatpush1.msra.mxu0 %v87
    %107 = vmatprep.subr.mxu0 0.0
    %108 = vmatpush1.msra.mxu0 %v88
    %109 = vmatprep.subr.mxu0 0.0
    %110 = vmatpush1.msra.mxu0 %v89
    %111 = vmatprep.subr.mxu0 0.0
    %112 = vmatpush1.msra.mxu0 %v90
    %113 = vmatprep.subr.mxu0 0.0
    %114 = vmatpush1.msra.mxu0 %v91
    %115 = vmatprep.subr.mxu0 0.0
    %116 = vmatpush1.msra.mxu0 %v92
    %117 = vmatprep.subr.mxu0 0.0
    %118 = vmatpush1.msra.mxu0 %v93
    %119 = vmatprep.subr.mxu0 0.0
    %120 = vmatpush1.msra.mxu0 %v94
    %121 = vmatprep.subr.mxu0 0.0
    %122 = vmatpush1.msra.mxu0 0.0
    %123 = vmatprep.subr.mxu0 0.0
    %124 = vmatpush1.msra.mxu0 0.0
    %125 = vmatprep.subr.mxu0 0.0
    %126 = vmatpush1.msra.mxu0 0.0
    %127 = vmatprep.subr.mxu0 0.0
    %128 = vmatpush1.msra.mxu0 0.0
    %129 = vmatprep.subr.mxu0 0.0
    %130 = vmatpush1.msra.mxu0 0.0
    %131 = vmatprep.subr.mxu0 0.0
    %132 = vmatpush1.msra.mxu0 0.0
    %133 = vmatprep.subr.mxu0 0.0
    %134 = vmatpush1.msra.mxu0 0.0
    %135 = vmatprep.subr.mxu0 0.0
    %136 = vmatpush1.msra.mxu0 0.0
    %137 = vmatprep.subr.mxu0 0.0
    %138 = vmatpush1.msra.mxu0 0.0
    %139 = vmatprep.subr.mxu0 0.0
    %140 = vmatpush1.msra.mxu0 0.0
    %141 = vmatprep.subr.mxu0 0.0
    %142 = vmatpush1.msra.mxu0 0.0
    %143 = vmatprep.subr.mxu0 0.0
    %144 = vmatpush1.msra.mxu0 0.0
    %145 = vmatprep.subr.mxu0 0.0
    %146 = vmatpush1.msra.mxu0 0.0
    %147 = vmatprep.subr.mxu0 0.0
    %148 = vmatpush1.msra.mxu0 0.0
    %149 = vmatprep.subr.mxu0 0.0
    %150 = vmatpush1.msra.mxu0 0.0
    %151 = vmatprep.subr.mxu0 0.0
    %152 = vmatpush1.msra.mxu0 0.0
    %153 = vmatprep.subr.mxu0 0.0
    %154 = vmatpush1.msra.mxu0 0.0
    %155 = vmatprep.subr.mxu0 0.0
    %156 = vmatpush1.msra.mxu0 0.0
    %157 = vmatprep.subr.mxu0 0.0
    %158 = vmatpush1.msra.mxu0 0.0
    %159 = vmatprep.subr.mxu0 0.0
    %160 = vmatpush1.msra.mxu0 0.0
    %161 = vmatprep.subr.mxu0 0.0
    %162 = vmatpush1.msra.mxu0 0.0
    %163 = vmatprep.subr.mxu0 0.0
    %164 = vmatpush1.msra.mxu0 0.0
    %165 = vmatprep.subr.mxu0 0.0
    %166 = vmatpush1.msra.mxu0 0.0
    %167 = vmatprep.subr.mxu0 0.0
    %168 = vmatpush1.msra.mxu0 0.0
    %169 = vmatprep.mubr.f32.mxu0 0.0
    %170 = vmatmul.mubr.f32.gmra.mrb[0].mxu0 %v97
    %v171 = vpop.f32.mrb[0].mxu0
    %v172 = vadd.f32 0.0, %v171
    %v173 = vpop.f32.mrb[0].mxu0
    %174 = vmatprep.mubr.f32.mxu0 0.0
    %175 = vmatmul.mubr.f32.gmra.mrb[0].mxu0 %v100
    %v176 = vpop.f32.mrb[0].mxu0
    %v177 = vadd.f32 0.0, %v176
    %v178 = vpop.f32.mrb[0].mxu0
    %179 = vmatprep.mubr.f32.mxu0 0.0
    %180 = vmatmul.mubr.f32.gmra.mrb[0].mxu0 %v103
    %v181 = vpop.f32.mrb[0].mxu0
    %v182 = vadd.f32 0.0, %v181
    %v183 = vpop.f32.mrb[0].mxu0
    %184 = vdwg.mxu0
    %v185 = vld [vmem:[%s4] sm:$0x1]
    %v186 = vmul.f32 %v172, 1.442695
    %v187 = vpow.pop %v186
    %v188 = vmul.f32 %v177, 1.442695
    %v189 = vpow.pop %v188
    %v190 = vmul.f32 %v182, 1.442695
    %v191 = vpow.pop %v190
    %vm192 = vcmask 162816
    %v194 = vsel %vm192, %v185, 0
    %vm196 = vcmask 1043456
    %v198 = vsel %vm196, %v191, 0
    %200 = vmatprep.subr.mxu0 0.0
    %201 = vmatpush1.msra.mxu0 %v187
    %202 = vmatprep.subr.mxu0 0.0
    %203 = vmatpush1.msra.mxu0 %v189
    %204 = vmatprep.subr.mxu0 0.0
    %205 = vmatpush1.msra.mxu0 %v198
    %206 = vmatprep.subr.mxu0 0.0
    %207 = vmatpush1.msra.mxu0 0.0
    %208 = vmatprep.subr.mxu0 0.0
    %209 = vmatpush1.msra.mxu0 0.0
    %210 = vmatprep.subr.mxu0 0.0
    %211 = vmatpush1.msra.mxu0 0.0
    %212 = vmatprep.subr.mxu0 0.0
    %213 = vmatpush1.msra.mxu0 0.0
    %214 = vmatprep.subr.mxu0 0.0
    %215 = vmatpush1.msra.mxu0 0.0
    %216 = vmatprep.subr.mxu0 0.0
    %217 = vmatpush1.msra.mxu0 0.0
    %218 = vmatprep.subr.mxu0 0.0
    %219 = vmatpush1.msra.mxu0 0.0
    %220 = vmatprep.subr.mxu0 0.0
    %221 = vmatpush1.msra.mxu0 0.0
    %222 = vmatprep.subr.mxu0 0.0
    %223 = vmatpush1.msra.mxu0 0.0
    %224 = vmatprep.subr.mxu0 0.0
    %225 = vmatpush1.msra.mxu0 0.0
    %226 = vmatprep.subr.mxu0 0.0
    %227 = vmatpush1.msra.mxu0 0.0
    %228 = vmatprep.subr.mxu0 0.0
    %229 = vmatpush1.msra.mxu0 0.0
    %230 = vmatprep.subr.mxu0 0.0
    %231 = vmatpush1.msra.mxu0 0.0
    %232 = vmatprep.subr.mxu0 0.0
    %233 = vmatpush1.msra.mxu0 0.0
    %234 = vmatprep.subr.mxu0 0.0
    %235 = vmatpush1.msra.mxu0 0.0
    %236 = vmatprep.subr.mxu0 0.0
    %237 = vmatpush1.msra.mxu0 0.0
    %238 = vmatprep.subr.mxu0 0.0
    %239 = vmatpush1.msra.mxu0 0.0
    %240 = vmatprep.subr.mxu0 0.0
    %241 = vmatpush1.msra.mxu0 0.0
    %242 = vmatprep.subr.mxu0 0.0
    %243 = vmatpush1.msra.mxu0 0.0
    %244 = vmatprep.subr.mxu0 0.0
    %245 = vmatpush1.msra.mxu0 0.0
    %246 = vmatprep.subr.mxu0 0.0
    %247 = vmatpush1.msra.mxu0 0.0
    %248 = vmatprep.subr.mxu0 0.0
    %249 = vmatpush1.msra.mxu0 0.0
    %250 = vmatprep.subr.mxu0 0.0
    %251 = vmatpush1.msra.mxu0 0.0
    %252 = vmatprep.subr.mxu0 0.0
    %253 = vmatpush1.msra.mxu0 0.0
    %254 = vmatprep.subr.mxu0 0.0
    %255 = vmatpush1.msra.mxu0 0.0
    %256 = vmatprep.subr.mxu0 0.0
    %257 = vmatpush1.msra.mxu0 0.0
    %258 = vmatprep.subr.mxu0 0.0
    %259 = vmatpush1.msra.mxu0 0.0
    %260 = vmatprep.subr.mxu0 0.0
    %261 = vmatpush1.msra.mxu0 0.0
    %262 = vmatprep.subr.mxu0 0.0
    %263 = vmatpush1.msra.mxu0 0.0
    %264 = vmatprep.mubr.f32.mxu0 0.0
    %265 = vmatmul.mubr.f32.gmra.mrb[0].mxu0 %v194
    %v266 = vpop.f32.mrb[0].mxu0
    %v267 = vadd.f32 0.0, %v266
    %v268 = vpop.f32.mrb[0].mxu0
    %269 = vdwg.mxu0
    %v270 = vld [vmem:[#allocation2] sm:$0xff]
    %v271 = vld [vmem:[#allocation2 + $0x8] sm:$0xff]
    %v272 = vld [vmem:[#allocation2 + $0x10] sm:$0xff]
    %v273 = vld [vmem:[#allocation2 + $0x18] sm:$0xff]
    %v274 = vld [vmem:[#allocation2 + $0x20] sm:$0xff]
    %v275 = vld [vmem:[#allocation2 + $0x28] sm:$0xff]
    %v276 = vld [vmem:[#allocation2 + $0x30] sm:$0xff]
    %v277 = vld [vmem:[#allocation2 + $0x38] sm:$0xff]
    %v279 = vsel %vm95, %v267, 0
    %281 = vmatprep.subr.mxu0 0.0
    %282 = vmatpush1.msra.mxu0 %v270
    %283 = vmatprep.subr.mxu0 0.0
    %284 = vmatpush1.msra.mxu0 %v271
    %285 = vmatprep.subr.mxu0 0.0
    %286 = vmatpush1.msra.mxu0 %v272
    %287 = vmatprep.subr.mxu0 0.0
    %288 = vmatpush1.msra.mxu0 %v273
    %289 = vmatprep.subr.mxu0 0.0
    %290 = vmatpush1.msra.mxu0 %v274
    %291 = vmatprep.subr.mxu0 0.0
    %292 = vmatpush1.msra.mxu0 %v275
    %293 = vmatprep.subr.mxu0 0.0
    %294 = vmatpush1.msra.mxu0 %v276
    %295 = vmatprep.subr.mxu0 0.0
    %296 = vmatpush1.msra.mxu0 %v277
    %297 = vmatprep.subr.mxu0 0.0
    %298 = vmatpush1.msra.mxu0 0.0
    %299 = vmatprep.subr.mxu0 0.0
    %300 = vmatpush1.msra.mxu0 0.0
    %301 = vmatprep.subr.mxu0 0.0
    %302 = vmatpush1.msra.mxu0 0.0
    %303 = vmatprep.subr.mxu0 0.0
    %304 = vmatpush1.msra.mxu0 0.0
    %305 = vmatprep.subr.mxu0 0.0
    %306 = vmatpush1.msra.mxu0 0.0
    %307 = vmatprep.subr.mxu0 0.0
    %308 = vmatpush1.msra.mxu0 0.0
    %309 = vmatprep.subr.mxu0 0.0
    %310 = vmatpush1.msra.mxu0 0.0
    %311 = vmatprep.subr.mxu0 0.0
    %312 = vmatpush1.msra.mxu0 0.0
    %313 = vmatprep.subr.mxu0 0.0
    %314 = vmatpush1.msra.mxu0 0.0
    %315 = vmatprep.subr.mxu0 0.0
    %316 = vmatpush1.msra.mxu0 0.0
    %317 = vmatprep.subr.mxu0 0.0
    %318 = vmatpush1.msra.mxu0 0.0
    %319 = vmatprep.subr.mxu0 0.0
    %320 = vmatpush1.msra.mxu0 0.0
    %321 = vmatprep.subr.mxu0 0.0
    %322 = vmatpush1.msra.mxu0 0.0
    %323 = vmatprep.subr.mxu0 0.0
    %324 = vmatpush1.msra.mxu0 0.0
    %325 = vmatprep.subr.mxu0 0.0
    %326 = vmatpush1.msra.mxu0 0.0
    %327 = vmatprep.subr.mxu0 0.0
    %328 = vmatpush1.msra.mxu0 0.0
    %329 = vmatprep.subr.mxu0 0.0
    %330 = vmatpush1.msra.mxu0 0.0
    %331 = vmatprep.subr.mxu0 0.0
    %332 = vmatpush1.msra.mxu0 0.0
    %333 = vmatprep.subr.mxu0 0.0
    %334 = vmatpush1.msra.mxu0 0.0
    %335 = vmatprep.subr.mxu0 0.0
    %336 = vmatpush1.msra.mxu0 0.0
    %337 = vmatprep.subr.mxu0 0.0
    %338 = vmatpush1.msra.mxu0 0.0
    %339 = vmatprep.subr.mxu0 0.0
    %340 = vmatpush1.msra.mxu0 0.0
    %341 = vmatprep.subr.mxu0 0.0
    %342 = vmatpush1.msra.mxu0 0.0
    %343 = vmatprep.subr.mxu0 0.0
    %344 = vmatpush1.msra.mxu0 0.0
    %345 = vmatprep.mubr.f32.mxu0 0.0
    %346 = vmatmul.mubr.f32.gmra.mrb[0].mxu0 %v279
    %v347 = vpop.f32.mrb[0].mxu0
    %v348 = vadd.f32 0.0, %v347
    %v349 = vpop.f32.mrb[0].mxu0
    %350 = vdwg.mxu0
    %vm351 = vcmask 516096
    %352 = vst.msk [vmem:[%s7] sm:$0x1] %vm351, %v348
    // Predicated region
    $region34: #{fn.1} parent=1 // pred_check
      _
    $region35: #{fn.1} parent=1 // pred_check_branch
      %354 = sbr.rel (0) target = $region37
    $region36: #{fn.1} parent=1 // pred_region
      _
    $region37: #{fn.1} parent=1 // pred_fallthru
      _
    // Predicated region
    $region38: #{fn.1} parent=1 // pred_check
      _
    $region39: #{fn.1} parent=1 // pred_check_branch
      %356 = sbr.rel (0) target = $region41
    $region40: #{fn.1} parent=1 // pred_region
      _
    $region41: #{fn.1} parent=1 // pred_fallthru
      _
    %357 = vsyncpa [#allocation3], 1

</llo_original>
